<compile_context>
chip_gen: v7x
topology: tpu7x:2x2x1
jax: 0.10.0
libtpu: 0.0.40
codegen_flags: <defaults>
</compile_context>

<pallas_src>
import jax
import jax.numpy as jnp
from jax.experimental import pallas as pl
from jax.experimental.pallas import tpu as pltpu


def critic_kernel(x_ref, w1_ref, b1_ref, w2_ref, b2_ref, w3_ref, b3_ref, out_ref):
    # Hidden layer 1: bf16 MXU matmul, f32 accumulate, f32 bias + ReLU.
    x = x_ref[...].astype(jnp.bfloat16)
    h = jnp.dot(x, w1_ref[...], preferred_element_type=jnp.float32) + b1_ref[...]
    h = jnp.maximum(h, 0.0)
    # Hidden layer 2.
    h = jnp.dot(h.astype(jnp.bfloat16), w2_ref[...],
                preferred_element_type=jnp.float32) + b2_ref[...]
    h = jnp.maximum(h, 0.0)
    # Value head (identity activation): f32 VPU multiply + lane reduce.
    # w3_ref is the (1, H1) value-head row; result is compact (tile_b, 1).
    v = jnp.sum(h * w3_ref[...], axis=-1, keepdims=True) + b3_ref[...]
    out_ref[...] = v


def _round_up(x, m):
    return ((x + m - 1) // m) * m


def prepare_critic_params(params):
    """One-time parameter prep, hoisted out of the per-call forward.

    params = (w1 [S,H0], b1 [1,H0], w2 [H0,H1], b2 [1,H1], w3 [H1,1], b3 [1,1]),
    i.e. weights stored as [in_features, out_features].
    MXU-layer weights are cast to bf16 once; the 1-wide value head stays f32
    as a (1, H1) row for the in-kernel VPU reduce.
    """
    w1, b1, w2, b2, w3, b3 = params
    return (
        w1.astype(jnp.bfloat16),
        jnp.asarray(b1, jnp.float32).reshape(1, -1),
        w2.astype(jnp.bfloat16),
        jnp.asarray(b2, jnp.float32).reshape(1, -1),
        jnp.asarray(w3, jnp.float32).reshape(1, -1),   # value-head row (1, H1)
        jnp.asarray(b3, jnp.float32).reshape(1, -1),   # (1, 1)
    )


def critic_forward(state, prepped, tile_b=4096):
    """state: [B, state_dim] (f32 or bf16) -> value [B, 1] float32."""
    w1b, b1, w2b, b2, w3r, b3 = prepped
    B, S = state.shape
    H0 = w1b.shape[1]
    H1 = w2b.shape[1]

    # Cap tile_b at ~B/2 (kept a multiple of 8) so the batch grid has >=2 tiles
    # whenever B allows it (both v7x TensorCores get work); floor at 8 rows.
    half_b = _round_up(max(pl.cdiv(B, 2), 1), 8)
    tile_b = max(8, min(tile_b, half_b))
    grid = (pl.cdiv(B, tile_b),)   # boundary block is clipped by Pallas; no jnp.pad

    resident = lambda arr: pl.BlockSpec(arr.shape, lambda i: (0, 0))

    param_bytes = sum(int(a.size) * a.dtype.itemsize for a in prepped)
    cost = pl.CostEstimate(
        flops=2 * B * (S * H0 + H0 * H1 + H1),
        transcendentals=0,
        bytes_accessed=B * S * state.dtype.itemsize + B * 4 + param_bytes,
    )

    out = pl.pallas_call(
        critic_kernel,
        out_shape=jax.ShapeDtypeStruct((B, 1), jnp.float32),
        grid=grid,
        in_specs=[
            pl.BlockSpec((tile_b, S), lambda i: (i, 0)),   # streamed batch tiles
            resident(w1b), resident(b1),                   # VMEM-resident params
            resident(w2b), resident(b2),
            resident(w3r), resident(b3),
        ],
        out_specs=pl.BlockSpec((tile_b, 1), lambda i: (i, 0)),  # compact output
        compiler_params=pltpu.CompilerParams(
            dimension_semantics=("parallel",),   # shard batch tiles across TCs
            vmem_limit_bytes=32 << 20,           # safe under v7x's 64 MiB VMEM
        ),
        cost_estimate=cost,
    )(state, w1b, b1, w2b, b2, w3r, b3)

    return out


def init_linear(key, fan_in, fan_out):
    """Deterministic init mimicking nn.Linear.reset_parameters (+/- 1/sqrt(fan_in))."""
    kw, kb = jax.random.split(key)
    bound = 1.0 / jnp.sqrt(jnp.float32(fan_in))
    w = jax.random.uniform(kw, (fan_in, fan_out), jnp.float32, -bound, bound)
    b = jax.random.uniform(kb, (1, fan_out), jnp.float32, -bound, bound)
    return w, b


def _reference_matched(state, params):
    """Same bf16-MXU / f32-accumulate recipe as the kernel."""
    w1, b1, w2, b2, w3, b3 = params
    xb = state.astype(jnp.bfloat16)
    h = jnp.maximum(jnp.dot(xb, w1.astype(jnp.bfloat16),
                            preferred_element_type=jnp.float32) + b1, 0.0)
    h = jnp.maximum(jnp.dot(h.astype(jnp.bfloat16), w2.astype(jnp.bfloat16),
                            preferred_element_type=jnp.float32) + b2, 0.0)
    return h @ w3 + b3   # value head in f32, like the kernel


def _reference_f32(state, params):
    w1, b1, w2, b2, w3, b3 = params
    h = jnp.maximum(state @ w1 + b1, 0.0)
    h = jnp.maximum(h @ w2 + b2, 0.0)
    return h @ w3 + b3


if __name__ == "__main__":
    # Small shapes consistent with Critic(state_dim, hidden_shape): output_dim = 1.
    batch = 8
    state_dim = 16
    hidden_shape = (32, 32)
    value_dim = 1

    key = jax.random.PRNGKey(0)
    k_x, k1, k2, k3, k_x2 = jax.random.split(key, 5)

    state = jax.random.normal(k_x, (batch, state_dim), jnp.float32)
    w1, b1 = init_linear(k1, state_dim, hidden_shape[0])
    w2, b2 = init_linear(k2, hidden_shape[0], hidden_shape[1])
    w3, b3 = init_linear(k3, hidden_shape[1], value_dim)
    params = (w1, b1, w2, b2, w3, b3)

    # One-time weight prep (hoisted out of the forward call).
    prepped = prepare_critic_params(params)

    # --- test 1: small batch, single tile -----------------------------------
    value = critic_forward(state, prepped)
    value = jax.block_until_ready(value)
    assert value.shape == (batch, value_dim)
    assert jnp.allclose(value, _reference_matched(state, params), atol=1e-3, rtol=1e-3)
    assert jnp.allclose(value, _reference_f32(state, params), atol=2e-2, rtol=2e-2)

    # --- test 2: multi-tile grid with a clipped boundary block --------------
    batch2 = 200   # 200 = 3*64 + 8 -> grid of 4 tiles, last one clipped
    state2 = jax.random.normal(k_x2, (batch2, state_dim), jnp.float32)
    value2 = critic_forward(state2, prepped, tile_b=64)
    value2 = jax.block_until_ready(value2)
    assert value2.shape == (batch2, value_dim)
    assert jnp.allclose(value2, _reference_matched(state2, params), atol=1e-3, rtol=1e-3)
    assert jnp.allclose(value2, _reference_f32(state2, params), atol=2e-2, rtol=2e-2)

    print("KERNEL_OK")
</pallas_src>

<mosaic_0001>
module attributes {stable_mosaic.version = 11 : i64} {
  func.func @critic_kernel(%arg0: i32, %arg1: memref<8x16xf32, #tpu.memory_space<vmem>>, %arg2: memref<16x32xbf16, #tpu.memory_space<vmem>>, %arg3: memref<1x32xf32, #tpu.memory_space<vmem>>, %arg4: memref<32x32xbf16, #tpu.memory_space<vmem>>, %arg5: memref<1x32xf32, #tpu.memory_space<vmem>>, %arg6: memref<1x32xf32, #tpu.memory_space<vmem>>, %arg7: memref<1x1xf32, #tpu.memory_space<vmem>>, %arg8: memref<8x1xf32, #tpu.memory_space<vmem>>) attributes {dimension_semantics = [#tpu.dimension_semantics<parallel>], iteration_bounds = array<i64: 1>, scalar_prefetch = 0 : i64, scratch_operands = 0 : i64, tpu.core_type = #tpu.core_type<tc>, window_params = [{transform_indices = @transform_0, window_bounds = array<i64: 8, 16>}, {pipeline_mode = #tpu.pipeline_mode<synchronous>, transform_indices = @transform_1, window_bounds = array<i64: 16, 32>}, {pipeline_mode = #tpu.pipeline_mode<synchronous>, transform_indices = @transform_2, window_bounds = array<i64: 1, 32>}, {pipeline_mode = #tpu.pipeline_mode<synchronous>, transform_indices = @transform_3, window_bounds = array<i64: 32, 32>}, {pipeline_mode = #tpu.pipeline_mode<synchronous>, transform_indices = @transform_4, window_bounds = array<i64: 1, 32>}, {pipeline_mode = #tpu.pipeline_mode<synchronous>, transform_indices = @transform_5, window_bounds = array<i64: 1, 32>}, {pipeline_mode = #tpu.pipeline_mode<synchronous>, transform_indices = @transform_6, window_bounds = array<i64: 1, 1>}, {transform_indices = @transform_7, window_bounds = array<i64: 8, 1>}]} {
    %c0 = arith.constant 0 : index
    %c0_0 = arith.constant 0 : index
    %0 = vector.load %arg1[%c0, %c0_0] : memref<8x16xf32, #tpu.memory_space<vmem>>, vector<8x16xf32>
    %1 = arith.truncf %0 : vector<8x16xf32> to vector<8x16xbf16>
    %c0_1 = arith.constant 0 : index
    %c0_2 = arith.constant 0 : index
    %2 = vector.load %arg2[%c0_1, %c0_2] : memref<16x32xbf16, #tpu.memory_space<vmem>>, vector<16x32xbf16>
    %cst = arith.constant dense<0.000000e+00> : vector<8x32xf32>
    %3 = tpu.matmul %1, %2, %cst {dimension_numbers = #tpu.dot_dimension_numbers<[1], [0], [0], [1], [0, 0, 1, 1], [], []>} : vector<8x16xbf16>, vector<16x32xbf16>, vector<8x32xf32> -> vector<8x32xf32>
    %c0_3 = arith.constant 0 : index
    %c0_4 = arith.constant 0 : index
    %4 = vector.load %arg3[%c0_3, %c0_4] : memref<1x32xf32, #tpu.memory_space<vmem>>, vector<1x32xf32>
    %5 = vector.broadcast %4 : vector<1x32xf32> to vector<8x32xf32>
    %6 = arith.addf %3, %5 : vector<8x32xf32>
    %cst_5 = arith.constant 0.000000e+00 : f32
    %7 = vector.broadcast %cst_5 : f32 to vector<8x32xf32>
    %8 = arith.maximumf %6, %7 : vector<8x32xf32>
    %9 = arith.truncf %8 : vector<8x32xf32> to vector<8x32xbf16>
    %c0_6 = arith.constant 0 : index
    %c0_7 = arith.constant 0 : index
    %10 = vector.load %arg4[%c0_6, %c0_7] : memref<32x32xbf16, #tpu.memory_space<vmem>>, vector<32x32xbf16>
    %cst_8 = arith.constant dense<0.000000e+00> : vector<8x32xf32>
    %11 = tpu.matmul %9, %10, %cst_8 {dimension_numbers = #tpu.dot_dimension_numbers<[1], [0], [0], [1], [0, 0, 1, 1], [], []>} : vector<8x32xbf16>, vector<32x32xbf16>, vector<8x32xf32> -> vector<8x32xf32>
    %c0_9 = arith.constant 0 : index
    %c0_10 = arith.constant 0 : index
    %12 = vector.load %arg5[%c0_9, %c0_10] : memref<1x32xf32, #tpu.memory_space<vmem>>, vector<1x32xf32>
    %13 = vector.broadcast %12 : vector<1x32xf32> to vector<8x32xf32>
    %14 = arith.addf %11, %13 : vector<8x32xf32>
    %cst_11 = arith.constant 0.000000e+00 : f32
    %15 = vector.broadcast %cst_11 : f32 to vector<8x32xf32>
    %16 = arith.maximumf %14, %15 : vector<8x32xf32>
    %c0_12 = arith.constant 0 : index
    %c0_13 = arith.constant 0 : index
    %17 = vector.load %arg6[%c0_12, %c0_13] : memref<1x32xf32, #tpu.memory_space<vmem>>, vector<1x32xf32>
    %18 = vector.broadcast %17 : vector<1x32xf32> to vector<8x32xf32>
    %19 = arith.mulf %16, %18 : vector<8x32xf32>
    %cst_14 = arith.constant dense<0.000000e+00> : vector<8xf32>
    %20 = vector.multi_reduction <add>, %19, %cst_14 [1] : vector<8x32xf32> to vector<8xf32>
    %21 = vector.shape_cast %20 : vector<8xf32> to vector<8x1xf32>
    %c0_15 = arith.constant 0 : index
    %c0_16 = arith.constant 0 : index
    %22 = vector.load %arg7[%c0_15, %c0_16] : memref<1x1xf32, #tpu.memory_space<vmem>>, vector<1x1xf32>
    %23 = vector.broadcast %22 : vector<1x1xf32> to vector<8x1xf32>
    %24 = arith.addf %21, %23 : vector<8x1xf32>
    %c0_17 = arith.constant 0 : index
    %c0_18 = arith.constant 0 : index
    %25 = vector.load %arg8[%c0_17, %c0_18] : memref<8x1xf32, #tpu.memory_space<vmem>>, vector<8x1xf32>
    tpu.vector_store %arg8[%c0_17, %c0_18], %24 {strides = array<i32>} : memref<8x1xf32, #tpu.memory_space<vmem>>, vector<8x1xf32>,
    return
  }
  func.func @transform_0(%arg0: i32) -> (i32, i32) {
    %c0_i32 = arith.constant 0 : i32
    %c0_i32_0 = arith.constant 0 : i32
    return %arg0, %c0_i32 : i32, i32
  }
  func.func @transform_1(%arg0: i32) -> (i32, i32) {
    %c0_i32 = arith.constant 0 : i32
    %c0_i32_0 = arith.constant 0 : i32
    %c0_i32_1 = arith.constant 0 : i32
    return %c0_i32, %c0_i32_0 : i32, i32
  }
  func.func @transform_2(%arg0: i32) -> (i32, i32) {
    %c0_i32 = arith.constant 0 : i32
    %c0_i32_0 = arith.constant 0 : i32
    %c0_i32_1 = arith.constant 0 : i32
    return %c0_i32, %c0_i32_0 : i32, i32
  }
  func.func @transform_3(%arg0: i32) -> (i32, i32) {
    %c0_i32 = arith.constant 0 : i32
    %c0_i32_0 = arith.constant 0 : i32
    %c0_i32_1 = arith.constant 0 : i32
    return %c0_i32, %c0_i32_0 : i32, i32
  }
  func.func @transform_4(%arg0: i32) -> (i32, i32) {
    %c0_i32 = arith.constant 0 : i32
    %c0_i32_0 = arith.constant 0 : i32
    %c0_i32_1 = arith.constant 0 : i32
    return %c0_i32, %c0_i32_0 : i32, i32
  }
  func.func @transform_5(%arg0: i32) -> (i32, i32) {
    %c0_i32 = arith.constant 0 : i32
    %c0_i32_0 = arith.constant 0 : i32
    %c0_i32_1 = arith.constant 0 : i32
    return %c0_i32, %c0_i32_0 : i32, i32
  }
  func.func @transform_6(%arg0: i32) -> (i32, i32) {
    %c0_i32 = arith.constant 0 : i32
    %c0_i32_0 = arith.constant 0 : i32
    %c0_i32_1 = arith.constant 0 : i32
    return %c0_i32, %c0_i32_0 : i32, i32
  }
  func.func @transform_7(%arg0: i32) -> (i32, i32) {
    %c0_i32 = arith.constant 0 : i32
    %c0_i32_0 = arith.constant 0 : i32
    return %arg0, %c0_i32 : i32, i32
  }
}

</mosaic_0001>

<llo_original>
// kernel: tpu_custom_call.1
$region0: #{tpu_custom_call.1}
  #allocation0 [shape = 'u32[]', space=smem, size = 0x4, offset = 0x4, fixed_abs, tag = 'smem constant byte address 0x4 - core index']
  #allocation1 [shape = 'u32[144,128]{1,0:T(1,128)}', space=vmem, size = 0x12000, scoped, tag = 'internal scratch']
  #allocation2 [shape = 'f32[1,1]{1,0:T(1,128)S(1)}', space=vmem, size = 0x200, scoped, tag = 'scoped memory for tpu_custom_call.1']
  %s0 = inlined_call_operand.hbm [shape: f32[8,16], index: 0, kind: input, shape index: {}]
  %s1 = inlined_call_operand.hbm [shape: bf16[16,32], index: 1, kind: input, shape index: {}]
  %s2 = inlined_call_operand.vmem [shape: f32[1,32], index: 2, kind: input, shape index: {}]
  %s3 = inlined_call_operand.hbm [shape: bf16[32,32], index: 3, kind: input, shape index: {}]
  %s4 = inlined_call_operand.vmem [shape: f32[1,32], index: 4, kind: input, shape index: {}]
  %s5 = inlined_call_operand.vmem [shape: f32[1,32], index: 5, kind: input, shape index: {}]
  %s6 = inlined_call_operand.<no memory space> [shape: f32[1,1], index: 6, kind: input, shape index: {}]
  %s7 = inlined_call_operand.vmem [shape: f32[8,1], index: 7, kind: output, shape index: {}]
  %s8 = sld [smem:[#allocation0]]
  $region50: #{tpu_custom_call.1} parent=0
    _
  %s10 = ssub.s32 1, %s8
  %s11 = scalar_select 0, %s10, %s8
  %v12 = vstv %s6
  %13 = vst [vmem:[#allocation2] sm:$0x1] %v12
  $region1: #{tpu_custom_call.1} parent=0
    #allocation3 [shape = 'u8[4096]{0}', space=vmem, size = 0x1000, scoped, tag = 'input window, operand 0, single buffered']
    #allocation4 [shape = 's32[1]{0}', space=sflag, size = 0x4, scoped, tag = 'scoped memory for tpu_custom_call.1']
    #allocation5 [shape = 'u8[4096]{0}', space=vmem, size = 0x1000, scoped, tag = 'input window, operand 1, single buffered']
    #allocation6 [shape = 's32[1]{0}', space=sflag, size = 0x4, scoped, tag = 'scoped memory for tpu_custom_call.1']
    #allocation7 [shape = 'u8[8192]{0}', space=vmem, size = 0x2000, scoped, tag = 'input window, operand 3, single buffered']
    %14 = vsyncpa [#allocation4], 0
    %15 = vsyncpa [#allocation6], 0
    // Predicated region
    $region2: #{tpu_custom_call.1} parent=1 // pred_check
      _
    $region3: #{tpu_custom_call.1} parent=1 // pred_check_branch
      %17 = sbr.rel (0) target = $region5
    $region4: #{tpu_custom_call.1} parent=1 // pred_region
      %s19 = ssub.s32 128, 128
      %20 = vsyncadd [#allocation4], %s19
      %s22 = sshll.u32 [#allocation3], 4
      %s23 = int_to_ptr.vmem [resolvable:$true] %s22
      %25 = dma.hbm_to_vmem [thread:$0]  %s0, 128, %s23, [#allocation4]
    $region5: #{tpu_custom_call.1} parent=1 // pred_fallthru
      _
    // Predicated region
    $region6: #{tpu_custom_call.1} parent=1 // pred_check
      _
    $region7: #{tpu_custom_call.1} parent=1 // pred_check_branch
      %27 = sbr.rel (0) target = $region9
    $region8: #{tpu_custom_call.1} parent=1 // pred_region
      %s29 = ssub.s32 128, 128
      %30 = vsyncadd [#allocation6], %s29
      %s31 = sshll.u32 [#allocation5], 4
      %s32 = int_to_ptr.vmem [resolvable:$true] %s31
      %37 = dma.hbm_to_vmem [thread:$0]  %s1, 128, %s32, [#allocation6], 64, 64, 4
    $region9: #{tpu_custom_call.1} parent=1 // pred_fallthru
      _
    // Predicated region
    $region10: #{tpu_custom_call.1} parent=1 // pred_check
      _
    $region11: #{tpu_custom_call.1} parent=1 // pred_check_branch
      %39 = sbr.rel (0) target = $region13
    $region12: #{tpu_custom_call.1} parent=1 // pred_region
      _
    $region13: #{tpu_custom_call.1} parent=1 // pred_fallthru
      _
    // Predicated region
    $region14: #{tpu_custom_call.1} parent=1 // pred_check
      _
    $region15: #{tpu_custom_call.1} parent=1 // pred_check_branch
      %41 = sbr.rel (0) target = $region17
    $region16: #{tpu_custom_call.1} parent=1 // pred_region
      %s43 = ssub.s32 256, 256
      %44 = vsyncadd [#allocation6], %s43
      %s45 = sshll.u32 [#allocation7], 4
      %s46 = int_to_ptr.vmem [resolvable:$true] %s45
      %51 = dma.hbm_to_vmem [thread:$0]  %s3, 256, %s46, [#allocation6], 64, 64, 4
    $region17: #{tpu_custom_call.1} parent=1 // pred_fallthru
      _
    // Predicated region
    $region18: #{tpu_custom_call.1} parent=1 // pred_check
      _
    $region19: #{tpu_custom_call.1} parent=1 // pred_check_branch
      %53 = sbr.rel (0) target = $region21
    $region20: #{tpu_custom_call.1} parent=1 // pred_region
      _
    $region21: #{tpu_custom_call.1} parent=1 // pred_fallthru
      _
    // Predicated region
    $region22: #{tpu_custom_call.1} parent=1 // pred_check
      _
    $region23: #{tpu_custom_call.1} parent=1 // pred_check_branch
      %55 = sbr.rel (0) target = $region25
    $region24: #{tpu_custom_call.1} parent=1 // pred_region
      _
    $region25: #{tpu_custom_call.1} parent=1 // pred_fallthru
      _
    // Predicated region
    $region26: #{tpu_custom_call.1} parent=1 // pred_check
      _
    $region27: #{tpu_custom_call.1} parent=1 // pred_check_branch
      %57 = sbr.rel (0) target = $region29
    $region28: #{tpu_custom_call.1} parent=1 // pred_region
      _
    $region29: #{tpu_custom_call.1} parent=1 // pred_fallthru
      _
    // Predicated region
    $region30: #{tpu_custom_call.1} parent=1 // pred_check
      _
    $region31: #{tpu_custom_call.1} parent=1 // pred_check_branch
      %59 = sbr.rel (0) target = $region33
    $region32: #{tpu_custom_call.1} parent=1 // pred_region
      %60 = dma.done [#allocation4], 128
    $region33: #{tpu_custom_call.1} parent=1 // pred_fallthru
      _
    // Predicated region
    $region34: #{tpu_custom_call.1} parent=1 // pred_check
      _
    $region35: #{tpu_custom_call.1} parent=1 // pred_check_branch
      %62 = sbr.rel (0) target = $region37
    $region36: #{tpu_custom_call.1} parent=1 // pred_region
      %63 = dma.done [#allocation6], 128
    $region37: #{tpu_custom_call.1} parent=1 // pred_fallthru
      _
    // Predicated region
    $region38: #{tpu_custom_call.1} parent=1 // pred_check
      _
    $region39: #{tpu_custom_call.1} parent=1 // pred_check_branch
      %65 = sbr.rel (0) target = $region41
    $region40: #{tpu_custom_call.1} parent=1 // pred_region
      %66 = dma.done [#allocation6], 256
    $region41: #{tpu_custom_call.1} parent=1 // pred_fallthru
      _
    %v68 = vld [vmem:[#allocation3] sm:$0xff]
    %v69 = vpack.c.bf16 %v68, %v68
    %v70 = vld [vmem:[#allocation5] sm:$0xf]
    %v71 = vld [vmem:[#allocation5 + $0x4] sm:$0xf]
    %v72 = vld [vmem:[%s2] sm:$0x1]
    %v74 = vlaneseq
    %v75 = vshrl.u32 %v74, 7
    %v76 = vsub.s32 0, %v75
    %v77 = vrot.slane %v72, %v76
    %v81 = vunpack.c.l.b16 %v70
    %v82 = vunpack.c.l.b16 %v71
    %v83 = vpack.c.b16 %v82, %v81
    %vm85 = vcmask 130048
    %v87 = vsel %vm85, %v69, 0
    %89 = vmatprep.subr.bf16.mxu0 0
    %90 = vmatpush1.bf16.msra.mxu0 %v83
    %91 = vmatprep.subr.bf16.mxu0 0
    %92 = vmatpush1.bf16.msra.mxu0 0
    %93 = vmatprep.subr.bf16.mxu0 0
    %94 = vmatpush1.bf16.msra.mxu0 0
    %95 = vmatprep.subr.bf16.mxu0 0
    %96 = vmatpush1.bf16.msra.mxu0 0
    %97 = vmatprep.subr.bf16.mxu0 0
    %98 = vmatpush1.bf16.msra.mxu0 0
    %99 = vmatprep.subr.bf16.mxu0 0
    %100 = vmatpush1.bf16.msra.mxu0 0
    %101 = vmatprep.subr.bf16.mxu0 0
    %102 = vmatpush1.bf16.msra.mxu0 0
    %103 = vmatprep.subr.bf16.mxu0 0
    %104 = vmatpush1.bf16.msra.mxu0 0
    %105 = vmatprep.subr.bf16.mxu0 0
    %106 = vmatpush1.bf16.msra.mxu0 0
    %107 = vmatprep.subr.bf16.mxu0 0
    %108 = vmatpush1.bf16.msra.mxu0 0
    %109 = vmatprep.subr.bf16.mxu0 0
    %110 = vmatpush1.bf16.msra.mxu0 0
    %111 = vmatprep.subr.bf16.mxu0 0
    %112 = vmatpush1.bf16.msra.mxu0 0
    %113 = vmatprep.subr.bf16.mxu0 0
    %114 = vmatpush1.bf16.msra.mxu0 0
    %115 = vmatprep.subr.bf16.mxu0 0
    %116 = vmatpush1.bf16.msra.mxu0 0
    %117 = vmatprep.subr.bf16.mxu0 0
    %118 = vmatpush1.bf16.msra.mxu0 0
    %119 = vmatprep.subr.bf16.mxu0 0
    %120 = vmatpush1.bf16.msra.mxu0 0
    %121 = vmatprep.mubr.bf16.mxu0 0
    %122 = vmatmul.mubr.bf16.gmra.mrb[0].mxu0 %v87
    %v123 = vpop.f32.mrb[0].mxu0
    %v124 = vadd.f32 %v77, %v123
    %v125 = vpop.f32.mrb[0].mxu0
    %v126 = vpop.f32.mrb[0].mxu0
    %v127 = vpop.f32.mrb[0].mxu0
    %128 = vdwg.mxu0
    %v129 = vmax.f32 %v124, 0.0
    %v130 = vpack.c.bf16 %v129, %v129
    %v131 = vld [vmem:[#allocation7] sm:$0xf]
    %v132 = vld [vmem:[#allocation7 + $0x4] sm:$0xf]
    %v133 = vld [vmem:[#allocation7 + $0x8] sm:$0xf]
    %v134 = vld [vmem:[#allocation7 + $0xc] sm:$0xf]
    %v135 = vld [vmem:[%s4] sm:$0x1]
    %v137 = vlaneseq
    %v138 = vshrl.u32 %v137, 7
    %v139 = vsub.s32 0, %v138
    %v140 = vrot.slane %v135, %v139
    %v146 = vunpack.c.l.b16 %v131
    %v147 = vunpack.c.l.b16 %v132
    %v148 = vunpack.c.l.b16 %v133
    %v149 = vunpack.c.l.b16 %v134
    %v150 = vpack.c.b16 %v147, %v146
    %v151 = vpack.c.b16 %v149, %v148
    %vm154 = vcmask 261120
    %v156 = vsel %vm154, %v130, 0
    %158 = vmatprep.subr.bf16.mxu0 0
    %159 = vmatpush1.bf16.msra.mxu0 %v150
    %160 = vmatprep.subr.bf16.mxu0 0
    %161 = vmatpush1.bf16.msra.mxu0 %v151
    %162 = vmatprep.subr.bf16.mxu0 0
    %163 = vmatpush1.bf16.msra.mxu0 0
    %164 = vmatprep.subr.bf16.mxu0 0
    %165 = vmatpush1.bf16.msra.mxu0 0
    %166 = vmatprep.subr.bf16.mxu0 0
    %167 = vmatpush1.bf16.msra.mxu0 0
    %168 = vmatprep.subr.bf16.mxu0 0
    %169 = vmatpush1.bf16.msra.mxu0 0
    %170 = vmatprep.subr.bf16.mxu0 0
    %171 = vmatpush1.bf16.msra.mxu0 0
    %172 = vmatprep.subr.bf16.mxu0 0
    %173 = vmatpush1.bf16.msra.mxu0 0
    %174 = vmatprep.subr.bf16.mxu0 0
    %175 = vmatpush1.bf16.msra.mxu0 0
    %176 = vmatprep.subr.bf16.mxu0 0
    %177 = vmatpush1.bf16.msra.mxu0 0
    %178 = vmatprep.subr.bf16.mxu0 0
    %179 = vmatpush1.bf16.msra.mxu0 0
    %180 = vmatprep.subr.bf16.mxu0 0
    %181 = vmatpush1.bf16.msra.mxu0 0
    %182 = vmatprep.subr.bf16.mxu0 0
    %183 = vmatpush1.bf16.msra.mxu0 0
    %184 = vmatprep.subr.bf16.mxu0 0
    %185 = vmatpush1.bf16.msra.mxu0 0
    %186 = vmatprep.subr.bf16.mxu0 0
    %187 = vmatpush1.bf16.msra.mxu0 0
    %188 = vmatprep.subr.bf16.mxu0 0
    %189 = vmatpush1.bf16.msra.mxu0 0
    %190 = vmatprep.mubr.bf16.mxu0 0
    %191 = vmatmul.mubr.bf16.gmra.mrb[0].mxu0 %v156
    %v192 = vpop.f32.mrb[0].mxu0
    %v193 = vadd.f32 %v140, %v192
    %v194 = vpop.f32.mrb[0].mxu0
    %v195 = vpop.f32.mrb[0].mxu0
    %v196 = vpop.f32.mrb[0].mxu0
    %197 = vdwg.mxu0
    %v198 = vmax.f32 %v193, 0.0
    %v199 = vld [vmem:[%s5] sm:$0x1]
    %v201 = vlaneseq
    %v202 = vshrl.u32 %v201, 7
    %v203 = vsub.s32 0, %v202
    %v204 = vrot.slane %v199, %v203
    %v206 = vmul.f32 %v198, %v204
    %v207 = vsel %vm154, %v206, 0.0
    %208 = vadd.xlane.f32.xlu0 %v207
    %v209 = vpop.xlane.xlu0 %208
    %v210 = vld [vmem:[#allocation2] sm:$0x1]
    %v212 = vlaneseq
    %v213 = vshrl.u32 %v212, 7
    %v214 = vsub.s32 0, %v213
    %v215 = vrot.slane %v210, %v214
    %v217 = vadd.f32 %v209, %v215
    %vm218 = vcmask 7168
    %219 = vst.msk [vmem:[%s7] sm:$0xff] %vm218, %v217
    // Predicated region
    $region42: #{tpu_custom_call.1} parent=1 // pred_check
      _
    $region43: #{tpu_custom_call.1} parent=1 // pred_check_branch
      %221 = sbr.rel (0) target = $region45
    $region44: #{tpu_custom_call.1} parent=1 // pred_region
      _
    $region45: #{tpu_custom_call.1} parent=1 // pred_fallthru
      _
    // Predicated region
    $region46: #{tpu_custom_call.1} parent=1 // pred_check
      _
    $region47: #{tpu_custom_call.1} parent=1 // pred_check_branch
      %223 = sbr.rel (0) target = $region49
    $region48: #{tpu_custom_call.1} parent=1 // pred_region
      _
    $region49: #{tpu_custom_call.1} parent=1 // pred_fallthru
      _
    %224 = vsyncpa [#allocation4], 1
    %225 = vsyncpa [#allocation6], 1

</llo_original>
